<compile_context>
chip_gen: v7x
topology: tpu7x:2x2x1
jax: 0.10.0
libtpu: 0.0.40
codegen_flags: <defaults>
</compile_context>

<pallas_src>
import functools
import jax
import jax.numpy as jnp
from jax import lax
from jax.experimental import pallas as pl
from jax.experimental.pallas import tpu as pltpu


# ----------------------------------------------------------------------------
# helpers
# ----------------------------------------------------------------------------
def _pad_to(n, mult):
    return ((n + mult - 1) // mult) * mult


def _pick_tile(dim, pref, align):
    """Largest tile <= pref that divides `dim` and is a multiple of `align`;
    falls back to the full dim (full-extent blocks are always legal)."""
    if dim <= pref:
        return dim
    t = (pref // align) * align
    while t >= align:
        if dim % t == 0:
            return t
        t -= align
    return dim


def _vmem_limit(tile_bytes):
    # double-buffered tiles + headroom, clamped to a budget safe on v5e/v6e/v7x
    need = 2 * tile_bytes + (4 << 20)
    return int(min(max(need, 16 << 20), 40 << 20))


# ----------------------------------------------------------------------------
# Kernel 1: fused linear + bias + ReLU (patch-embed projection), M-tiled
# ----------------------------------------------------------------------------
def _linear_relu_kernel(x_ref, w_ref, b_ref, o_ref):
    y = jnp.dot(x_ref[...], w_ref[...], preferred_element_type=jnp.float32)
    o_ref[...] = jnp.maximum(y + b_ref[...], 0.0).astype(o_ref.dtype)


def linear_relu(x, w, b, *, out_dtype=jnp.float32, tm_pref=512):
    """relu(x @ w + b).  x: [M, K] bf16, w: [K, N] bf16 (N % 128 == 0),
    b: [1, N] f32.  Tiled/pipelined over M; w and b stay resident."""
    M, K = x.shape
    Kw, N = w.shape
    assert Kw == K
    tm = _pick_tile(M, tm_pref, 8)
    tile_bytes = (tm * K * x.dtype.itemsize + K * N * w.dtype.itemsize
                  + N * 4 + tm * N * jnp.dtype(out_dtype).itemsize)
    return pl.pallas_call(
        _linear_relu_kernel,
        out_shape=jax.ShapeDtypeStruct((M, N), out_dtype),
        grid=(pl.cdiv(M, tm),),
        in_specs=[
            pl.BlockSpec((tm, K), lambda i: (i, 0)),
            pl.BlockSpec((K, N), lambda i: (0, 0)),
            pl.BlockSpec((1, N), lambda i: (0, 0)),
        ],
        out_specs=pl.BlockSpec((tm, N), lambda i: (i, 0)),
        compiler_params=pltpu.CompilerParams(
            dimension_semantics=("parallel",),
            vmem_limit_bytes=_vmem_limit(tile_bytes)),
    )(x, w, b)


# ----------------------------------------------------------------------------
# Kernel 2: coarse matching (tiled two-pass dual softmax)
# ----------------------------------------------------------------------------
def _dual_softmax_stats_kernel(shift_ref, f0_ref, f1_ref, rowsum_ref, colsum_ref,
                               *, scale):
    li = pl.program_id(1)
    si = pl.program_id(2)
    tS = f1_ref.shape[1]

    @pl.when(si == 0)
    def _init_row():
        rowsum_ref[...] = jnp.zeros_like(rowsum_ref)

    @pl.when((li == 0) & (si == 0))
    def _init_col():
        colsum_ref[...] = jnp.zeros_like(colsum_ref)

    f0 = f0_ref[0] * scale                       # [tL, Cp] bf16, scale folded here
    f1 = f1_ref[0]                               # [tS, Cp] bf16
    sim = lax.dot_general(f0, f1, (((1,), (1,)), ((), ())),
                          preferred_element_type=jnp.float32)    # [tL, tS] (NT)
    e = jnp.exp(sim - shift_ref[0])              # shift_ref[0]: [1,1]; e <= 1
    rowsum_ref[0] += jnp.sum(e, axis=1, keepdims=True)           # [tL, 1]
    s0 = pl.multiple_of(si * tS, tS)
    colsum_ref[0, :, pl.ds(s0, tS)] += jnp.sum(e, axis=0, keepdims=True)


def _dual_softmax_conf_kernel(shift_ref, f0_ref, f1_ref, rowsum_ref, colsum_ref,
                              conf_ref, *, scale):
    f0 = f0_ref[0] * scale
    f1 = f1_ref[0]
    sim = lax.dot_general(f0, f1, (((1,), (1,)), ((), ())),
                          preferred_element_type=jnp.float32)    # [tL, tS]
    e = jnp.exp(sim - shift_ref[0])
    rinv = pl.reciprocal(jnp.maximum(rowsum_ref[0], 1e-30), approx=True)  # [tL,1]
    cinv = pl.reciprocal(jnp.maximum(colsum_ref[0], 1e-30), approx=True)  # [1,tS]
    conf_ref[0] = (e * rinv) * (e * cinv)        # softmax over S * softmax over L


def coarse_matching(feat_c0, feat_c1, c_feat, temperature=0.1, thr=0.2,
                    tl_pref=512, ts_pref=512):
    """feat_c*: [B, L|S, Cp] (bf16, Cp lane-padded; only first c_feat channels
    are non-zero).  Returns (conf [B,L,S] f32, mutual-NN bool mask [B,L,S])."""
    B, L, Cp = feat_c0.shape
    S = feat_c1.shape[1]
    scale = 1.0 / (float(c_feat) * float(temperature))

    # Per-batch Cauchy-Schwarz upper bound on sim -> exp argument <= 0.
    def _max_norm(f):
        return jnp.max(jnp.sqrt(jnp.sum(jnp.square(f.astype(jnp.float32)), -1)), -1)
    shift = (scale * _max_norm(feat_c0) * _max_norm(feat_c1)).reshape(B, 1, 1)
    shift = shift.astype(jnp.float32)

    tL = _pick_tile(L, tl_pref, 8)
    tS = _pick_tile(S, ts_pref, 128)
    grid = (B, pl.cdiv(L, tL), pl.cdiv(S, tS))
    f_bytes = tL * Cp * feat_c0.dtype.itemsize + tS * Cp * feat_c1.dtype.itemsize

    # Pass 1: row/col sums of e = exp(sim - shift).
    stats_kernel = functools.partial(_dual_softmax_stats_kernel, scale=scale)
    rowsum, colsum = pl.pallas_call(
        stats_kernel,
        out_shape=(jax.ShapeDtypeStruct((B, L, 1), jnp.float32),
                   jax.ShapeDtypeStruct((B, 1, S), jnp.float32)),
        grid=grid,
        in_specs=[
            pl.BlockSpec((1, 1, 1), lambda b, l, s: (b, 0, 0)),
            pl.BlockSpec((1, tL, Cp), lambda b, l, s: (b, l, 0)),
            pl.BlockSpec((1, tS, Cp), lambda b, l, s: (b, s, 0)),
        ],
        out_specs=(
            pl.BlockSpec((1, tL, 1), lambda b, l, s: (b, l, 0)),
            pl.BlockSpec((1, 1, S), lambda b, l, s: (b, 0, 0)),
        ),
        compiler_params=pltpu.CompilerParams(
            dimension_semantics=("parallel", "arbitrary", "arbitrary"),
            vmem_limit_bytes=_vmem_limit(f_bytes + tL * 4 + S * 4 + 512)),
    )(shift, feat_c0, feat_c1)

    # Pass 2: recompute sim tiles and write conf (fully parallel grid).
    conf_kernel = functools.partial(_dual_softmax_conf_kernel, scale=scale)
    conf = pl.pallas_call(
        conf_kernel,
        out_shape=jax.ShapeDtypeStruct((B, L, S), jnp.float32),
        grid=grid,
        in_specs=[
            pl.BlockSpec((1, 1, 1), lambda b, l, s: (b, 0, 0)),
            pl.BlockSpec((1, tL, Cp), lambda b, l, s: (b, l, 0)),
            pl.BlockSpec((1, tS, Cp), lambda b, l, s: (b, s, 0)),
            pl.BlockSpec((1, tL, 1), lambda b, l, s: (b, l, 0)),
            pl.BlockSpec((1, 1, tS), lambda b, l, s: (b, 0, s)),
        ],
        out_specs=pl.BlockSpec((1, tL, tS), lambda b, l, s: (b, l, s)),
        compiler_params=pltpu.CompilerParams(
            dimension_semantics=("parallel", "parallel", "parallel"),
            vmem_limit_bytes=_vmem_limit(f_bytes + tL * 4 + tS * 4
                                         + tL * tS * 4 + 512)),
    )(shift, feat_c0, feat_c1, rowsum, colsum)

    # Mutual-nearest-neighbour mask + threshold: tiny follow-up kept in plain
    # JAX (per review: avoid a second full [B,L,S] int32 Pallas output).
    max_s = jnp.max(conf, axis=2, keepdims=True)
    max_l = jnp.max(conf, axis=1, keepdims=True)
    mask = (conf > thr) & (conf == max_s) & (conf == max_l)
    return conf, mask


# ----------------------------------------------------------------------------
# Backbone glue (patchify = im2col for stride-p non-overlapping conv)
# ----------------------------------------------------------------------------
def patchify(x, p, k_pad):
    """[N, C, H, W] -> [N, (H//p)*(W//p), k_pad] bf16 (row-major over h, w);
    the C*p*p patch vector is zero-padded up to k_pad."""
    N, C, H, W = x.shape
    x = x.reshape(N, C, H // p, p, W // p, p)
    x = x.transpose(0, 2, 4, 1, 3, 5)                 # N, H//p, W//p, C, p, p
    x = x.reshape(N, (H // p) * (W // p), C * p * p)
    k = C * p * p
    if k_pad > k:
        x = jnp.pad(x, ((0, 0), (0, 0), (0, k_pad - k)))
    return x.astype(jnp.bfloat16)


class MatchformerPallas:
    def __init__(self, in_ch=1, d_coarse=64, d_fine=32, key=jax.random.PRNGKey(42)):
        self.in_ch, self.d_coarse, self.d_fine = in_ch, d_coarse, d_fine
        self.kc = in_ch * 8 * 8
        self.kf = in_ch * 2 * 2
        # lane/sublane-friendly padded sizes; zero padding is exact for
        # matmul + bias + relu (padded channels stay identically zero).
        self.kc_p = _pad_to(self.kc, 8)
        self.kf_p = _pad_to(self.kf, 8)
        self.nc_p = _pad_to(d_coarse, 128)
        self.nf_p = _pad_to(d_fine, 128)
        k0, k1, k2, k3 = jax.random.split(key, 4)
        w_c = jax.random.normal(k0, (self.kc, d_coarse), jnp.float32) / jnp.sqrt(self.kc)
        b_c = jax.random.normal(k1, (1, d_coarse), jnp.float32) * 0.01
        w_f = jax.random.normal(k2, (self.kf, d_fine), jnp.float32) / jnp.sqrt(self.kf)
        b_f = jax.random.normal(k3, (1, d_fine), jnp.float32) * 0.01
        self.w_c = jnp.zeros((self.kc_p, self.nc_p), jnp.bfloat16
                             ).at[:self.kc, :d_coarse].set(w_c.astype(jnp.bfloat16))
        self.b_c = jnp.zeros((1, self.nc_p), jnp.float32).at[:, :d_coarse].set(b_c)
        self.w_f = jnp.zeros((self.kf_p, self.nf_p), jnp.bfloat16
                             ).at[:self.kf, :d_fine].set(w_f.astype(jnp.bfloat16))
        self.b_f = jnp.zeros((1, self.nf_p), jnp.float32).at[:, :d_fine].set(b_f)

    def backbone(self, imgs):
        """imgs: [N, C, H, W] -> (feats_c [N, Tc, nc_p] bf16 (lane-padded),
        feats_f [N, Tf, d_fine] f32, hw_c, hw_f)."""
        N, C, H, W = imgs.shape
        # coarse (stride 8) — keep the 128-lane-padded channels for the matcher
        pc = patchify(imgs, 8, self.kc_p)                      # [N, Tc, kc_p]
        Tc = pc.shape[1]
        fc = linear_relu(pc.reshape(N * Tc, self.kc_p), self.w_c, self.b_c,
                         out_dtype=jnp.bfloat16)
        fc = fc.reshape(N, Tc, self.nc_p)
        # fine (stride 2)
        pf = patchify(imgs, 2, self.kf_p)                      # [N, Tf, kf_p]
        Tf = pf.shape[1]
        ff = linear_relu(pf.reshape(N * Tf, self.kf_p), self.w_f, self.b_f,
                         out_dtype=jnp.float32)
        ff = ff.reshape(N, Tf, self.nf_p)[..., :self.d_fine]
        return fc, ff, (H // 8, W // 8), (H // 2, W // 2)

    def __call__(self, data):
        data.update({
            'bs': data['image0'].shape[0],
            'hw0_i': data['image0'].shape[2:],
            'hw1_i': data['image1'].shape[2:],
        })
        bs = data['bs']
        if data['hw0_i'] == data['hw1_i']:
            imgs = jnp.concatenate([data['image0'], data['image1']], axis=0)
            feats_c, feats_f, hw_c, hw_f = self.backbone(imgs)
            feat_c0, feat_c1 = feats_c[:bs], feats_c[bs:]
            feat_f0, feat_f1 = feats_f[:bs], feats_f[bs:]
            hw0_c = hw1_c = hw_c
            hw0_f = hw1_f = hw_f
        else:
            feat_c0, feat_f0, hw0_c, hw0_f = self.backbone(data['image0'])
            feat_c1, feat_f1, hw1_c, hw1_f = self.backbone(data['image1'])
        data.update({'hw0_c': hw0_c, 'hw1_c': hw1_c, 'hw0_f': hw0_f, 'hw1_f': hw1_f})

        # feat_c is already in 'n (h w) c' order (matches the reference
        # rearrange); only the first d_coarse channels are non-zero.
        conf_matrix, mnn_mask = coarse_matching(feat_c0, feat_c1, self.d_coarse,
                                                temperature=0.1, thr=0.2)
        data.update({
            'conf_matrix': conf_matrix,
            'match_mask': mnn_mask.astype(jnp.int8),
            'num_matches': jnp.sum(mnn_mask),
            'feat_f0': feat_f0, 'feat_f1': feat_f1,
        })
        return data


if __name__ == "__main__":
    key = jax.random.PRNGKey(0)
    k0, k1 = jax.random.split(key)
    B, C, H, W = 2, 1, 32, 32
    image0 = jax.random.normal(k0, (B, C, H, W), jnp.float32)
    image1 = jax.random.normal(k1, (B, C, H, W), jnp.float32)

    model = MatchformerPallas(in_ch=C, d_coarse=64, d_fine=32)
    out = model({'image0': image0, 'image1': image1})

    conf = jax.block_until_ready(out['conf_matrix'])
    mask = jax.block_until_ready(out['match_mask'])

    L = (H // 8) * (W // 8)
    assert conf.shape == (B, L, L) and mask.shape == (B, L, L)
    assert bool(jnp.all(jnp.isfinite(conf)))
    assert bool(jnp.all(conf >= 0.0))
    print("KERNEL_OK")
</pallas_src>

<mosaic_0001>
module attributes {stable_mosaic.version = 11 : i64} {
  func.func @_linear_relu_kernel(%arg0: i32, %arg1: memref<64x64xbf16, #tpu.memory_space<vmem>>, %arg2: memref<64x128xbf16, #tpu.memory_space<vmem>>, %arg3: memref<1x128xf32, #tpu.memory_space<vmem>>, %arg4: memref<64x128xbf16, #tpu.memory_space<vmem>>) attributes {dimension_semantics = [#tpu.dimension_semantics<parallel>], iteration_bounds = array<i64: 1>, scalar_prefetch = 0 : i64, scratch_operands = 0 : i64, tpu.core_type = #tpu.core_type<tc>, window_params = [{transform_indices = @transform_0, window_bounds = array<i64: 64, 64>}, {pipeline_mode = #tpu.pipeline_mode<synchronous>, transform_indices = @transform_1, window_bounds = array<i64: 64, 128>}, {pipeline_mode = #tpu.pipeline_mode<synchronous>, transform_indices = @transform_2, window_bounds = array<i64: 1, 128>}, {transform_indices = @transform_3, window_bounds = array<i64: 64, 128>}]} {
    %c0 = arith.constant 0 : index
    %c0_0 = arith.constant 0 : index
    %0 = vector.load %arg1[%c0, %c0_0] : memref<64x64xbf16, #tpu.memory_space<vmem>>, vector<64x64xbf16>
    %c0_1 = arith.constant 0 : index
    %c0_2 = arith.constant 0 : index
    %1 = vector.load %arg2[%c0_1, %c0_2] : memref<64x128xbf16, #tpu.memory_space<vmem>>, vector<64x128xbf16>
    %cst = arith.constant dense<0.000000e+00> : vector<64x128xf32>
    %2 = tpu.matmul %0, %1, %cst {dimension_numbers = #tpu.dot_dimension_numbers<[1], [0], [0], [1], [0, 0, 1, 1], [], []>} : vector<64x64xbf16>, vector<64x128xbf16>, vector<64x128xf32> -> vector<64x128xf32>
    %c0_3 = arith.constant 0 : index
    %c0_4 = arith.constant 0 : index
    %3 = vector.load %arg3[%c0_3, %c0_4] : memref<1x128xf32, #tpu.memory_space<vmem>>, vector<1x128xf32>
    %4 = vector.broadcast %3 : vector<1x128xf32> to vector<64x128xf32>
    %5 = arith.addf %2, %4 : vector<64x128xf32>
    %cst_5 = arith.constant 0.000000e+00 : f32
    %6 = vector.broadcast %cst_5 : f32 to vector<64x128xf32>
    %7 = arith.maximumf %5, %6 : vector<64x128xf32>
    %8 = arith.truncf %7 : vector<64x128xf32> to vector<64x128xbf16>
    %c0_6 = arith.constant 0 : index
    %c0_7 = arith.constant 0 : index
    %9 = vector.load %arg4[%c0_6, %c0_7] : memref<64x128xbf16, #tpu.memory_space<vmem>>, vector<64x128xbf16>
    tpu.vector_store %arg4[%c0_6, %c0_7], %8 {strides = array<i32>} : memref<64x128xbf16, #tpu.memory_space<vmem>>, vector<64x128xbf16>,
    return
  }
  func.func @transform_0(%arg0: i32) -> (i32, i32) {
    %c0_i32 = arith.constant 0 : i32
    %c0_i32_0 = arith.constant 0 : i32
    return %arg0, %c0_i32 : i32, i32
  }
  func.func @transform_1(%arg0: i32) -> (i32, i32) {
    %c0_i32 = arith.constant 0 : i32
    %c0_i32_0 = arith.constant 0 : i32
    %c0_i32_1 = arith.constant 0 : i32
    return %c0_i32, %c0_i32_0 : i32, i32
  }
  func.func @transform_2(%arg0: i32) -> (i32, i32) {
    %c0_i32 = arith.constant 0 : i32
    %c0_i32_0 = arith.constant 0 : i32
    %c0_i32_1 = arith.constant 0 : i32
    return %c0_i32, %c0_i32_0 : i32, i32
  }
  func.func @transform_3(%arg0: i32) -> (i32, i32) {
    %c0_i32 = arith.constant 0 : i32
    %c0_i32_0 = arith.constant 0 : i32
    return %arg0, %c0_i32 : i32, i32
  }
}

</mosaic_0001>

<llo_original>
// kernel: tpu_custom_call.1
$region0: #{tpu_custom_call.1}
  #allocation0 [shape = 'u32[]', space=smem, size = 0x4, offset = 0x4, fixed_abs, tag = 'smem constant byte address 0x4 - core index']
  #allocation1 [shape = 'u32[144,128]{1,0:T(1,128)}', space=vmem, size = 0x12000, scoped, tag = 'internal scratch']
  %s0 = inlined_call_operand.hbm [shape: bf16[64,64], index: 0, kind: input, shape index: {}]
  %s1 = inlined_call_operand.hbm [shape: bf16[64,128], index: 1, kind: input, shape index: {}]
  %s2 = inlined_call_operand.vmem [shape: f32[1,128], index: 2, kind: input, shape index: {}]
  %s3 = inlined_call_operand.hbm [shape: bf16[64,128], index: 3, kind: output, shape index: {}]
  %s4 = sld [smem:[#allocation0]]
  $region30: #{tpu_custom_call.1} parent=0
    _
  %s6 = ssub.s32 1, %s4
  %s7 = scalar_select 0, %s6, %s4
  $region1: #{tpu_custom_call.1} parent=0
    #allocation2 [shape = 'u8[16384]{0}', space=vmem, size = 0x4000, scoped, tag = 'input window, operand 0, single buffered']
    #allocation3 [shape = 's32[1]{0}', space=sflag, size = 0x4, scoped, tag = 'scoped memory for tpu_custom_call.1']
    #allocation4 [shape = 's32[1]{0}', space=sflag, size = 0x4, scoped, tag = 'scoped memory for tpu_custom_call.1']
    #allocation5 [shape = 'u8[16384]{0}', space=vmem, size = 0x4000, scoped, tag = 'input window, operand 1, single buffered']
    #allocation6 [shape = 's32[1]{0}', space=sflag, size = 0x4, scoped, tag = 'scoped memory for tpu_custom_call.1']
    #allocation7 [shape = 'u8[16384]{0}', space=vmem, size = 0x4000, scoped, tag = 'output window, operand 0, single buffered']
    %8 = vsyncpa [#allocation3], 0
    %9 = vsyncpa [#allocation6], 0
    %10 = vsyncpa [#allocation4], 0
    // Predicated region
    $region2: #{tpu_custom_call.1} parent=1 // pred_check
      _
    $region3: #{tpu_custom_call.1} parent=1 // pred_check_branch
      %12 = sbr.rel (0) target = $region5
    $region4: #{tpu_custom_call.1} parent=1 // pred_region
      %s14 = ssub.s32 512, 512
      %15 = vsyncadd [#allocation3], %s14
      %s16 = sshll.u32 [#allocation2], 4
      %s17 = int_to_ptr.vmem [resolvable:$true] %s16
      %22 = dma.hbm_to_vmem [thread:$0]  %s0, 512, %s17, [#allocation3], 64, 64, 4
    $region5: #{tpu_custom_call.1} parent=1 // pred_fallthru
      _
    // Predicated region
    $region6: #{tpu_custom_call.1} parent=1 // pred_check
      _
    $region7: #{tpu_custom_call.1} parent=1 // pred_check_branch
      %24 = sbr.rel (0) target = $region9
    $region8: #{tpu_custom_call.1} parent=1 // pred_region
      %s26 = ssub.s32 512, 512
      %27 = vsyncadd [#allocation6], %s26
      %s28 = sshll.u32 [#allocation5], 4
      %s29 = int_to_ptr.vmem [resolvable:$true] %s28
      %34 = dma.hbm_to_vmem [thread:$0]  %s1, 512, %s29, [#allocation6], 64, 64, 4
    $region9: #{tpu_custom_call.1} parent=1 // pred_fallthru
      _
    // Predicated region
    $region10: #{tpu_custom_call.1} parent=1 // pred_check
      _
    $region11: #{tpu_custom_call.1} parent=1 // pred_check_branch
      %36 = sbr.rel (0) target = $region13
    $region12: #{tpu_custom_call.1} parent=1 // pred_region
      _
    $region13: #{tpu_custom_call.1} parent=1 // pred_fallthru
      _
    // Predicated region
    $region14: #{tpu_custom_call.1} parent=1 // pred_check
      _
    $region15: #{tpu_custom_call.1} parent=1 // pred_check_branch
      %38 = sbr.rel (0) target = $region17
    $region16: #{tpu_custom_call.1} parent=1 // pred_region
      %39 = dma.done [#allocation3], 512
    $region17: #{tpu_custom_call.1} parent=1 // pred_fallthru
      _
    // Predicated region
    $region18: #{tpu_custom_call.1} parent=1 // pred_check
      _
    $region19: #{tpu_custom_call.1} parent=1 // pred_check_branch
      %41 = sbr.rel (0) target = $region21
    $region20: #{tpu_custom_call.1} parent=1 // pred_region
      %42 = dma.done [#allocation6], 512
    $region21: #{tpu_custom_call.1} parent=1 // pred_fallthru
      _
    %v44 = vld [vmem:[#allocation2] sm:$0xf]
    %v45 = vld [vmem:[#allocation2 + $0x4] sm:$0xf]
    %v46 = vld [vmem:[#allocation2 + $0x8] sm:$0xf]
    %v47 = vld [vmem:[#allocation2 + $0xc] sm:$0xf]
    %v48 = vld [vmem:[#allocation2 + $0x10] sm:$0xf]
    %v49 = vld [vmem:[#allocation2 + $0x14] sm:$0xf]
    %v50 = vld [vmem:[#allocation2 + $0x18] sm:$0xf]
    %v51 = vld [vmem:[#allocation2 + $0x1c] sm:$0xf]
    %v52 = vld [vmem:[#allocation5] sm:$0xf]
    %v53 = vld [vmem:[#allocation5 + $0x4] sm:$0xf]
    %v54 = vld [vmem:[#allocation5 + $0x8] sm:$0xf]
    %v55 = vld [vmem:[#allocation5 + $0xc] sm:$0xf]
    %v56 = vld [vmem:[#allocation5 + $0x10] sm:$0xf]
    %v57 = vld [vmem:[#allocation5 + $0x14] sm:$0xf]
    %v58 = vld [vmem:[#allocation5 + $0x18] sm:$0xf]
    %v59 = vld [vmem:[#allocation5 + $0x1c] sm:$0xf]
    %v60 = vld [vmem:[%s2] sm:$0x1]
    %v62 = vlaneseq
    %v63 = vshrl.u32 %v62, 7
    %v64 = vsub.s32 0, %v63
    %v65 = vrot.slane %v60, %v64
    %v75 = vunpack.c.l.b16 %v44
    %v76 = vunpack.c.l.b16 %v45
    %v77 = vunpack.c.l.b16 %v46
    %v78 = vunpack.c.l.b16 %v47
    %v79 = vunpack.c.l.b16 %v48
    %v80 = vunpack.c.l.b16 %v49
    %v81 = vunpack.c.l.b16 %v50
    %v82 = vunpack.c.l.b16 %v51
    %v83 = vpack.c.b16 %v76, %v75
    %v84 = vpack.c.b16 %v78, %v77
    %v85 = vpack.c.b16 %v80, %v79
    %v86 = vpack.c.b16 %v82, %v81
    %v95 = vunpack.c.l.b16 %v52
    %v96 = vunpack.c.l.b16 %v53
    %v97 = vunpack.c.l.b16 %v54
    %v98 = vunpack.c.l.b16 %v55
    %v99 = vunpack.c.l.b16 %v56
    %v100 = vunpack.c.l.b16 %v57
    %v101 = vunpack.c.l.b16 %v58
    %v102 = vunpack.c.l.b16 %v59
    %v103 = vpack.c.b16 %v96, %v95
    %v104 = vpack.c.b16 %v98, %v97
    %v105 = vpack.c.b16 %v100, %v99
    %v106 = vpack.c.b16 %v102, %v101
    %vm111 = vcmask 523264
    %v113 = vsel %vm111, %v83, 0
    %v116 = vsel %vm111, %v84, 0
    %v119 = vsel %vm111, %v85, 0
    %v122 = vsel %vm111, %v86, 0
    %124 = vmatprep.subr.bf16.mxu0 0
    %125 = vmatpush1.bf16.msra.mxu0 %v103
    %126 = vmatprep.subr.bf16.mxu0 0
    %127 = vmatpush1.bf16.msra.mxu0 %v104
    %128 = vmatprep.subr.bf16.mxu0 0
    %129 = vmatpush1.bf16.msra.mxu0 %v105
    %130 = vmatprep.subr.bf16.mxu0 0
    %131 = vmatpush1.bf16.msra.mxu0 %v106
    %132 = vmatprep.subr.bf16.mxu0 0
    %133 = vmatpush1.bf16.msra.mxu0 0
    %134 = vmatprep.subr.bf16.mxu0 0
    %135 = vmatpush1.bf16.msra.mxu0 0
    %136 = vmatprep.subr.bf16.mxu0 0
    %137 = vmatpush1.bf16.msra.mxu0 0
    %138 = vmatprep.subr.bf16.mxu0 0
    %139 = vmatpush1.bf16.msra.mxu0 0
    %140 = vmatprep.subr.bf16.mxu0 0
    %141 = vmatpush1.bf16.msra.mxu0 0
    %142 = vmatprep.subr.bf16.mxu0 0
    %143 = vmatpush1.bf16.msra.mxu0 0
    %144 = vmatprep.subr.bf16.mxu0 0
    %145 = vmatpush1.bf16.msra.mxu0 0
    %146 = vmatprep.subr.bf16.mxu0 0
    %147 = vmatpush1.bf16.msra.mxu0 0
    %148 = vmatprep.subr.bf16.mxu0 0
    %149 = vmatpush1.bf16.msra.mxu0 0
    %150 = vmatprep.subr.bf16.mxu0 0
    %151 = vmatpush1.bf16.msra.mxu0 0
    %152 = vmatprep.subr.bf16.mxu0 0
    %153 = vmatpush1.bf16.msra.mxu0 0
    %154 = vmatprep.subr.bf16.mxu0 0
    %155 = vmatpush1.bf16.msra.mxu0 0
    %156 = vmatprep.mubr.bf16.mxu0 0
    %157 = vmatmul.mubr.bf16.gmra.mrb[0].mxu0 %v113
    %v158 = vpop.f32.mrb[0].mxu0
    %v159 = vadd.f32 %v65, %v158
    %v160 = vpop.f32.mrb[0].mxu0
    %v161 = vpop.f32.mrb[0].mxu0
    %v162 = vadd.f32 %v65, %v161
    %v163 = vpop.f32.mrb[0].mxu0
    %164 = vmatprep.mubr.bf16.mxu0 0
    %165 = vmatmul.mubr.bf16.gmra.mrb[0].mxu0 %v116
    %v166 = vpop.f32.mrb[0].mxu0
    %v167 = vadd.f32 %v65, %v166
    %v168 = vpop.f32.mrb[0].mxu0
    %v169 = vpop.f32.mrb[0].mxu0
    %v170 = vadd.f32 %v65, %v169
    %v171 = vpop.f32.mrb[0].mxu0
    %172 = vmatprep.mubr.bf16.mxu0 0
    %173 = vmatmul.mubr.bf16.gmra.mrb[0].mxu0 %v119
    %v174 = vpop.f32.mrb[0].mxu0
    %v175 = vadd.f32 %v65, %v174
    %v176 = vpop.f32.mrb[0].mxu0
    %v177 = vpop.f32.mrb[0].mxu0
    %v178 = vadd.f32 %v65, %v177
    %v179 = vpop.f32.mrb[0].mxu0
    %180 = vmatprep.mubr.bf16.mxu0 0
    %181 = vmatmul.mubr.bf16.gmra.mrb[0].mxu0 %v122
    %v182 = vpop.f32.mrb[0].mxu0
    %v183 = vadd.f32 %v65, %v182
    %v184 = vpop.f32.mrb[0].mxu0
    %v185 = vpop.f32.mrb[0].mxu0
    %v186 = vadd.f32 %v65, %v185
    %v187 = vpop.f32.mrb[0].mxu0
    %188 = vdwg.mxu0
    %v189 = vmax.f32 %v159, 0.0
    %v190 = vmax.f32 %v162, 0.0
    %v191 = vmax.f32 %v167, 0.0
    %v192 = vmax.f32 %v170, 0.0
    %v193 = vmax.f32 %v175, 0.0
    %v194 = vmax.f32 %v178, 0.0
    %v195 = vmax.f32 %v183, 0.0
    %v196 = vmax.f32 %v186, 0.0
    %v197 = vpack.c.bf16 %v190, %v189
    %v198 = vpack.c.bf16 %v192, %v191
    %v199 = vpack.c.bf16 %v194, %v193
    %v200 = vpack.c.bf16 %v196, %v195
    %v205 = vunpack.c.l.b16 %v197
    %v206 = vunpack.c.h.b16 %v197
    %v207 = vunpack.c.l.b16 %v198
    %v208 = vunpack.c.h.b16 %v198
    %v209 = vunpack.c.l.b16 %v199
    %v210 = vunpack.c.h.b16 %v199
    %v211 = vunpack.c.l.b16 %v200
    %v212 = vunpack.c.h.b16 %v200
    %v213 = vpack.c.b16 %v205, %v205
    %v214 = vpack.c.b16 %v206, %v206
    %v215 = vpack.c.b16 %v207, %v207
    %v216 = vpack.c.b16 %v208, %v208
    %v217 = vpack.c.b16 %v209, %v209
    %v218 = vpack.c.b16 %v210, %v210
    %v219 = vpack.c.b16 %v211, %v211
    %v220 = vpack.c.b16 %v212, %v212
    %229 = vst [vmem:[#allocation7] sm:$0xf] %v213
    %230 = vst [vmem:[#allocation7 + $0x4] sm:$0xf] %v214
    %231 = vst [vmem:[#allocation7 + $0x8] sm:$0xf] %v215
    %232 = vst [vmem:[#allocation7 + $0xc] sm:$0xf] %v216
    %233 = vst [vmem:[#allocation7 + $0x10] sm:$0xf] %v217
    %234 = vst [vmem:[#allocation7 + $0x14] sm:$0xf] %v218
    %235 = vst [vmem:[#allocation7 + $0x18] sm:$0xf] %v219
    %236 = vst [vmem:[#allocation7 + $0x1c] sm:$0xf] %v220
    // Predicated region
    $region22: #{tpu_custom_call.1} parent=1 // pred_check
      _
    $region23: #{tpu_custom_call.1} parent=1 // pred_check_branch
      %238 = sbr.rel (0) target = $region25
    $region24: #{tpu_custom_call.1} parent=1 // pred_region
      %s240 = ssub.s32 512, 512
      %241 = vsyncadd [#allocation4], %s240
      %s242 = sshll.u32 [#allocation7], 4
      %s243 = int_to_ptr.vmem [resolvable:$true] %s242
      %248 = dma.vmem_to_hbm [thread:$0]  %s243, 512, %s3, [#allocation4], 64, 64, 4
    $region25: #{tpu_custom_call.1} parent=1 // pred_fallthru
      _
    // Predicated region
    $region26: #{tpu_custom_call.1} parent=1 // pred_check
      _
    $region27: #{tpu_custom_call.1} parent=1 // pred_check_branch
      %250 = sbr.rel (0) target = $region29
    $region28: #{tpu_custom_call.1} parent=1 // pred_region
      %251 = dma.done [#allocation4], 512
    $region29: #{tpu_custom_call.1} parent=1 // pred_fallthru
      _
    %252 = vsyncpa [#allocation3], 1
    %253 = vsyncpa [#allocation6], 1
    %254 = vsyncpa [#allocation4], 1

</llo_original>
